<compile_context>
chip_gen: v5e
topology: v5e:2x2
jax: 0.10.0
libtpu: 0.0.40
codegen_flags: <defaults>
</compile_context>

<pallas_src>
import functools
import math

import jax
import jax.numpy as jnp
from jax import lax
from jax.experimental import pallas as pl
from jax.experimental.pallas import tpu as pltpu


def _round_up(x, m):
    return ((x + m - 1) // m) * m


# ----------------------------------------------------------------------------
# Kernels
# ----------------------------------------------------------------------------
def _fast_kernel(idx_ref, wts_ref, mat_ref, out_ref, *, mxu_dtype):
    """Resident-matrix path: one batch tile per grid step, full table in VMEM.

    idx_ref : (TB, K) int32  padded structure ids for this batch tile
    wts_ref : (TB, K) f32    transformed counts (0 for padding slots)
    mat_ref : (N_res, D) f   full (padded) embedding matrix, resident in VMEM
    out_ref : (TB, D)        output tile
    """
    idx = idx_ref[...]
    wts = wts_ref[...]
    tb, k = idx.shape
    n = mat_ref.shape[0]

    # Weighted "K-hot" dense slice of the sparse structure tensor.  Duplicate
    # indices sum (matches torch.sparse coalescing); no data-dependent memory
    # access -> inherently OOB-safe.  K is small & static -> unrolled VPU passes.
    col = lax.broadcasted_iota(jnp.int32, (tb, n), 1)
    s = jnp.zeros((tb, n), jnp.float32)
    for kk in range(k):
        s = s + jnp.where(col == idx[:, kk:kk + 1], wts[:, kk:kk + 1], 0.0)

    acc = jnp.dot(s.astype(mxu_dtype), mat_ref[...].astype(mxu_dtype),
                  preferred_element_type=jnp.float32)

    total = jnp.sum(wts, axis=-1, keepdims=True)          # (TB, 1)
    inv = jnp.where(total > 0.0,
                    pl.reciprocal(jnp.maximum(total, 1e-30), approx=True),
                    0.0)                                   # padded rows -> 0, no NaN
    out_ref[...] = (acc * inv).astype(out_ref.dtype)


def _tiled_kernel(mask_ref, fetch_ref, idx_ref, wts_ref, mat_ref, out_ref,
                  acc_ref, *, mxu_dtype):
    """General path: (batch-tile, table-tile) grid with skip of untouched tiles.

    mask_ref : (nbt*ntt,) int32 SMEM   1 iff batch tile i touches table tile j
    fetch_ref: (nbt*ntt,) int32 SMEM   table tile actually DMA'd at (i, j)
    idx_ref  : (TB, K) int32           structure ids for this batch tile
    wts_ref  : (TB, K) f32             transformed counts (0 = padding)
    mat_ref  : (TN, D)                 embedding-matrix tile (rows of tile fetch[i,j])
    out_ref  : (TB, D)                 output tile (written on last table step)
    acc_ref  : (TB, D) f32 VMEM        accumulator, persists across the table axis
    """
    i = pl.program_id(0)
    j = pl.program_id(1)
    ntt = pl.num_programs(1)

    @pl.when(j == 0)
    def _init():
        acc_ref[...] = jnp.zeros_like(acc_ref)

    active = mask_ref[i * ntt + j] != 0

    @pl.when(active)
    def _compute():
        idx = idx_ref[...]
        wts = wts_ref[...]
        tb, k = idx.shape
        tn = mat_ref.shape[0]
        # j-independent local iota: shift the (TB, K) indices instead of adding
        # j*tn to the big (TB, TN) iota every step (saves one VALU pass / step).
        idx_local = idx - j * tn
        col = lax.broadcasted_iota(jnp.int32, (tb, tn), 1)
        s = jnp.zeros((tb, tn), jnp.float32)
        for kk in range(k):
            s = s + jnp.where(col == idx_local[:, kk:kk + 1],
                              wts[:, kk:kk + 1], 0.0)
        acc_ref[...] += jnp.dot(s.astype(mxu_dtype),
                                mat_ref[...].astype(mxu_dtype),
                                preferred_element_type=jnp.float32)

    @pl.when(j == ntt - 1)
    def _finalize():
        total = jnp.sum(wts_ref[...], axis=-1, keepdims=True)   # (TB, 1)
        inv = jnp.where(total > 0.0,
                        pl.reciprocal(jnp.maximum(total, 1e-30), approx=True),
                        0.0)
        out_ref[...] = (acc_ref[...] * inv).astype(out_ref.dtype)


# ----------------------------------------------------------------------------
# Wrapper
# ----------------------------------------------------------------------------
def _transform_counts(counts, function):
    """JAX port of count_transform(); padding slots (count == 0) map to weight 0."""
    counts = counts.astype(jnp.float32)
    if function == 'identity':
        w = counts
    elif function == 'log':
        w = jnp.log2(counts + 1.0)            # math.log(c + 1, 2)
    elif function == 'sqrt':
        w = jnp.sqrt(counts)
    elif function == 'uniform':
        w = jnp.ones_like(counts)
    else:
        raise ValueError('Unknown counts transform "{}"'.format(function))
    return jnp.where(counts > 0, w, 0.0)


def structural_embed(matrix, indices, counts, counts_transform='log',
                     mxu_dtype=jnp.bfloat16):
    """(structure_tensor @ matrix) / row_count_sum with padded (indices, counts)."""
    N, D = matrix.shape
    B, K = indices.shape
    out_dtype = matrix.dtype
    if B == 0:
        return jnp.zeros((0, D), out_dtype)

    weights = _transform_counts(counts, counts_transform)
    indices = indices.astype(jnp.int32)

    # Lane-dense / MXU-friendly embedding dim.
    D_pad = _round_up(D, 128)
    if D_pad != D:
        matrix = jnp.pad(matrix, ((0, 0), (0, D_pad - D)))
    itemsize = jnp.dtype(matrix.dtype).itemsize

    # --- batch tiling --------------------------------------------------------
    TB = min(512, _round_up(B, 8))
    if B > 8:
        # keep >= 2 batch tiles so v7x's second TensorCore gets work
        TB = min(TB, _round_up((B + 1) // 2, 8))
    B_pad = _round_up(B, TB)
    if B_pad != B:
        indices = jnp.pad(indices, ((0, B_pad - B), (0, 0)))
        weights = jnp.pad(weights, ((0, B_pad - B), (0, 0)))
    nbt = B_pad // TB

    compiler_params_fast = pltpu.CompilerParams(
        dimension_semantics=("parallel",),
        vmem_limit_bytes=32 * 1024 * 1024,
    )
    compiler_params_tiled = pltpu.CompilerParams(
        dimension_semantics=("parallel", "arbitrary"),
        vmem_limit_bytes=32 * 1024 * 1024,
    )

    # --- fast path: whole matrix resident in VMEM ----------------------------
    N_res = _round_up(N, 256)
    fast = (N_res <= 2048) and (N_res * D_pad * itemsize <= 4 * 1024 * 1024)
    if fast:
        matrix_p = jnp.pad(matrix, ((0, N_res - N), (0, 0))) if N_res != N else matrix
        out = pl.pallas_call(
            functools.partial(_fast_kernel, mxu_dtype=mxu_dtype),
            out_shape=jax.ShapeDtypeStruct((B_pad, D_pad), out_dtype),
            grid_spec=pltpu.PrefetchScalarGridSpec(
                num_scalar_prefetch=0,
                grid=(nbt,),
                in_specs=[
                    pl.BlockSpec((TB, K), lambda i: (i, 0)),          # indices
                    pl.BlockSpec((TB, K), lambda i: (i, 0)),          # weights
                    pl.BlockSpec((N_res, D_pad), lambda i: (0, 0)),   # resident matrix
                ],
                out_specs=pl.BlockSpec((TB, D_pad), lambda i: (i, 0)),
            ),
            compiler_params=compiler_params_fast,
        )(indices, weights, matrix_p)
        return out[:B, :D]

    # --- general tiled path ---------------------------------------------------
    max_tn_bytes = 4 * 1024 * 1024
    max_tn = max(256, (max_tn_bytes // (D_pad * itemsize)) // 256 * 256)
    TN = min(_round_up(N, 256), max_tn, 2048)
    N_pad = _round_up(N, TN)
    if N_pad != N:
        matrix = jnp.pad(matrix, ((0, N_pad - N), (0, 0)))
    ntt = N_pad // TN

    # Per-(batch-tile, table-tile) touch bitmap + DMA redirection table.
    tile_of = indices // TN                                        # (B_pad, K)
    valid = weights > 0
    hit = (tile_of[:, :, None] == jnp.arange(ntt)[None, None, :]) & valid[:, :, None]
    mask = hit.reshape(nbt, TB, K, ntt).any(axis=(1, 2))           # (nbt, ntt)
    jidx = jnp.arange(ntt)[None, :]
    fwd = lax.cummax(jnp.where(mask, jidx, -1), axis=1)
    bwd = lax.cummin(jnp.where(mask, jidx, ntt), axis=1, reverse=True)
    fetch = jnp.where(fwd >= 0, fwd, jnp.minimum(bwd, ntt - 1)).astype(jnp.int32)
    mask_flat = mask.reshape(-1).astype(jnp.int32)
    fetch_flat = fetch.reshape(-1)

    out = pl.pallas_call(
        functools.partial(_tiled_kernel, mxu_dtype=mxu_dtype),
        out_shape=jax.ShapeDtypeStruct((B_pad, D_pad), out_dtype),
        grid_spec=pltpu.PrefetchScalarGridSpec(
            num_scalar_prefetch=2,
            grid=(nbt, ntt),
            in_specs=[
                pl.BlockSpec((TB, K), lambda i, j, m, f: (i, 0)),     # indices
                pl.BlockSpec((TB, K), lambda i, j, m, f: (i, 0)),     # weights
                # data-dependent table tile: skipped steps reuse the previously
                # fetched tile -> Pallas elides the DMA on revisits
                pl.BlockSpec((TN, D_pad),
                             lambda i, j, m, f, _ntt=ntt: (f[i * _ntt + j], 0)),
            ],
            out_specs=pl.BlockSpec((TB, D_pad), lambda i, j, m, f: (i, 0)),
            scratch_shapes=[pltpu.VMEM((TB, D_pad), jnp.float32)],
        ),
        compiler_params=compiler_params_tiled,
    )(mask_flat, fetch_flat, indices, weights, matrix)
    return out[:B, :D]


class SimpleStructuralEmbedder:
    """JAX/Pallas port of the PyTorch SimpleStructuralEmbedder forward pass."""

    def __init__(self, matrix, counts_transform='log'):
        # TODO(synk): structural_mapper.mapping / mapping_matrix are host-side
        # graph preprocessing with no Pallas equivalent; the matrix is taken as
        # a parameter and the ragged (indices, counts) lists as padded arrays.
        self.matrix = matrix
        self.counts_transform = counts_transform
        self.output_size = matrix.shape[1]

    def __call__(self, indices, counts, G=None):
        return structural_embed(self.matrix, indices, counts,
                                counts_transform=self.counts_transform)


# ----------------------------------------------------------------------------
# Self-test
# ----------------------------------------------------------------------------
def _reference(matrix, indices, counts):
    counts = counts.astype(jnp.float32)
    w = jnp.where(counts > 0, jnp.log2(counts + 1.0), 0.0)
    B = indices.shape[0]
    N = matrix.shape[0]
    S = jnp.zeros((B, N), jnp.float32)
    S = S.at[jnp.arange(B)[:, None], indices].add(w)
    total = jnp.maximum(jnp.sum(w, axis=1, keepdims=True), 1e-30)
    return (S @ matrix.astype(jnp.float32)) / total


if __name__ == "__main__":
    key = jax.random.PRNGKey(0)
    keys = jax.random.split(key, 8)

    # --- test 1: small vocabulary -> resident-matrix fast path ---------------
    num_values, vector_size = 96, 128
    batch, k_per_node = 8, 6
    matrix = jax.random.normal(keys[0], (num_values, vector_size), jnp.float32)
    indices = jax.random.randint(keys[1], (batch, k_per_node), 0, num_values,
                                 dtype=jnp.int32)
    counts = jax.random.randint(keys[2], (batch, k_per_node), 1, 10).astype(jnp.float32)
    pad = jax.random.bernoulli(keys[3], 0.25, (batch, k_per_node))
    counts = jnp.where(pad, 0.0, counts)
    counts = counts.at[:, 0].set(jnp.maximum(counts[:, 0], 1.0))  # >=1 real entry/row

    embedder = SimpleStructuralEmbedder(matrix, counts_transform='log')
    out_bf16 = jax.block_until_ready(embedder(indices, counts, G=None))
    out_f32 = jax.block_until_ready(
        structural_embed(matrix, indices, counts, 'log', mxu_dtype=jnp.float32))
    ref = _reference(matrix, indices, counts)

    assert out_bf16.shape == (batch, vector_size), out_bf16.shape
    assert out_bf16.dtype == matrix.dtype
    assert jnp.allclose(out_f32, ref, rtol=5e-3, atol=1e-3), "f32 fast path mismatch"
    assert jnp.allclose(out_bf16, ref, rtol=2.5e-2, atol=2.5e-2), "bf16 fast path mismatch"

    # --- test 2: larger vocabulary -> tiled path with table-tile skipping ----
    num_values2, vector_size2 = 3000, 128
    batch2, k2 = 24, 5
    matrix2 = jax.random.normal(keys[4], (num_values2, vector_size2), jnp.float32)
    # indices restricted to the first table tile so the second tile is skipped
    indices2 = jax.random.randint(keys[5], (batch2, k2), 0, 1024, dtype=jnp.int32)
    counts2 = jax.random.randint(keys[6], (batch2, k2), 1, 10).astype(jnp.float32)
    pad2 = jax.random.bernoulli(keys[7], 0.25, (batch2, k2))
    counts2 = jnp.where(pad2, 0.0, counts2)
    counts2 = counts2.at[:, 0].set(jnp.maximum(counts2[:, 0], 1.0))

    out2_bf16 = jax.block_until_ready(
        structural_embed(matrix2, indices2, counts2, 'log', mxu_dtype=jnp.bfloat16))
    out2_f32 = jax.block_until_ready(
        structural_embed(matrix2, indices2, counts2, 'log', mxu_dtype=jnp.float32))
    ref2 = _reference(matrix2, indices2, counts2)

    assert out2_bf16.shape == (batch2, vector_size2), out2_bf16.shape
    assert jnp.allclose(out2_f32, ref2, rtol=5e-3, atol=1e-3), "f32 tiled path mismatch"
    assert jnp.allclose(out2_bf16, ref2, rtol=2.5e-2, atol=2.5e-2), "bf16 tiled path mismatch"

    print("KERNEL_OK")
</pallas_src>

<mosaic_0001>
module attributes {stable_mosaic.version = 11 : i64} {
  func.func @_fast_kernel(%arg0: i32, %arg1: memref<8x6xi32, #tpu.memory_space<vmem>>, %arg2: memref<8x6xf32, #tpu.memory_space<vmem>>, %arg3: memref<256x128xf32, #tpu.memory_space<vmem>>, %arg4: memref<8x128xf32, #tpu.memory_space<vmem>>) attributes {dimension_semantics = [#tpu.dimension_semantics<parallel>], iteration_bounds = array<i64: 1>, scalar_prefetch = 0 : i64, scratch_operands = 0 : i64, tpu.core_type = #tpu.core_type<tc>, window_params = [{transform_indices = @transform_0, window_bounds = array<i64: 8, 6>}, {transform_indices = @transform_1, window_bounds = array<i64: 8, 6>}, {pipeline_mode = #tpu.pipeline_mode<synchronous>, transform_indices = @transform_2, window_bounds = array<i64: 256, 128>}, {transform_indices = @transform_3, window_bounds = array<i64: 8, 128>}]} {
    %c0 = arith.constant 0 : index
    %c0_0 = arith.constant 0 : index
    %0 = vector.load %arg1[%c0, %c0_0] : memref<8x6xi32, #tpu.memory_space<vmem>>, vector<8x6xi32>
    %c0_1 = arith.constant 0 : index
    %c0_2 = arith.constant 0 : index
    %1 = vector.load %arg2[%c0_1, %c0_2] : memref<8x6xf32, #tpu.memory_space<vmem>>, vector<8x6xf32>
    %2 = tpu.iota {dimensions = array<i32: 1>} : vector<8x256xi32>
    %cst = arith.constant 0.000000e+00 : f32
    %3 = vector.broadcast %cst : f32 to vector<8x256xf32>
    %4 = vector.extract_strided_slice %0 {offsets = [0, 0], sizes = [8, 1], strides = [1, 1]} : vector<8x6xi32> to vector<8x1xi32>
    %5 = vector.broadcast %4 : vector<8x1xi32> to vector<8x256xi32>
    %6 = arith.cmpi eq, %2, %5 : vector<8x256xi32>
    %7 = vector.extract_strided_slice %1 {offsets = [0, 0], sizes = [8, 1], strides = [1, 1]} : vector<8x6xf32> to vector<8x1xf32>
    %cst_3 = arith.constant 0.000000e+00 : f32
    %8 = vector.shape_cast %7 : vector<8x1xf32> to vector<8x1xf32>
    %9 = vector.broadcast %8 : vector<8x1xf32> to vector<8x256xf32>
    %10 = vector.broadcast %cst_3 : f32 to vector<8x256xf32>
    %11 = arith.select %6, %9, %10 : vector<8x256xi1>, vector<8x256xf32>
    %12 = arith.addf %3, %11 : vector<8x256xf32>
    %13 = vector.extract_strided_slice %0 {offsets = [0, 1], sizes = [8, 1], strides = [1, 1]} : vector<8x6xi32> to vector<8x1xi32>
    %14 = vector.broadcast %13 : vector<8x1xi32> to vector<8x256xi32>
    %15 = arith.cmpi eq, %2, %14 : vector<8x256xi32>
    %16 = vector.extract_strided_slice %1 {offsets = [0, 1], sizes = [8, 1], strides = [1, 1]} : vector<8x6xf32> to vector<8x1xf32>
    %cst_4 = arith.constant 0.000000e+00 : f32
    %17 = vector.shape_cast %16 : vector<8x1xf32> to vector<8x1xf32>
    %18 = vector.broadcast %17 : vector<8x1xf32> to vector<8x256xf32>
    %19 = vector.broadcast %cst_4 : f32 to vector<8x256xf32>
    %20 = arith.select %15, %18, %19 : vector<8x256xi1>, vector<8x256xf32>
    %21 = arith.addf %12, %20 : vector<8x256xf32>
    %22 = vector.extract_strided_slice %0 {offsets = [0, 2], sizes = [8, 1], strides = [1, 1]} : vector<8x6xi32> to vector<8x1xi32>
    %23 = vector.broadcast %22 : vector<8x1xi32> to vector<8x256xi32>
    %24 = arith.cmpi eq, %2, %23 : vector<8x256xi32>
    %25 = vector.extract_strided_slice %1 {offsets = [0, 2], sizes = [8, 1], strides = [1, 1]} : vector<8x6xf32> to vector<8x1xf32>
    %cst_5 = arith.constant 0.000000e+00 : f32
    %26 = vector.shape_cast %25 : vector<8x1xf32> to vector<8x1xf32>
    %27 = vector.broadcast %26 : vector<8x1xf32> to vector<8x256xf32>
    %28 = vector.broadcast %cst_5 : f32 to vector<8x256xf32>
    %29 = arith.select %24, %27, %28 : vector<8x256xi1>, vector<8x256xf32>
    %30 = arith.addf %21, %29 : vector<8x256xf32>
    %31 = vector.extract_strided_slice %0 {offsets = [0, 3], sizes = [8, 1], strides = [1, 1]} : vector<8x6xi32> to vector<8x1xi32>
    %32 = vector.broadcast %31 : vector<8x1xi32> to vector<8x256xi32>
    %33 = arith.cmpi eq, %2, %32 : vector<8x256xi32>
    %34 = vector.extract_strided_slice %1 {offsets = [0, 3], sizes = [8, 1], strides = [1, 1]} : vector<8x6xf32> to vector<8x1xf32>
    %cst_6 = arith.constant 0.000000e+00 : f32
    %35 = vector.shape_cast %34 : vector<8x1xf32> to vector<8x1xf32>
    %36 = vector.broadcast %35 : vector<8x1xf32> to vector<8x256xf32>
    %37 = vector.broadcast %cst_6 : f32 to vector<8x256xf32>
    %38 = arith.select %33, %36, %37 : vector<8x256xi1>, vector<8x256xf32>
    %39 = arith.addf %30, %38 : vector<8x256xf32>
    %40 = vector.extract_strided_slice %0 {offsets = [0, 4], sizes = [8, 1], strides = [1, 1]} : vector<8x6xi32> to vector<8x1xi32>
    %41 = vector.broadcast %40 : vector<8x1xi32> to vector<8x256xi32>
    %42 = arith.cmpi eq, %2, %41 : vector<8x256xi32>
    %43 = vector.extract_strided_slice %1 {offsets = [0, 4], sizes = [8, 1], strides = [1, 1]} : vector<8x6xf32> to vector<8x1xf32>
    %cst_7 = arith.constant 0.000000e+00 : f32
    %44 = vector.shape_cast %43 : vector<8x1xf32> to vector<8x1xf32>
    %45 = vector.broadcast %44 : vector<8x1xf32> to vector<8x256xf32>
    %46 = vector.broadcast %cst_7 : f32 to vector<8x256xf32>
    %47 = arith.select %42, %45, %46 : vector<8x256xi1>, vector<8x256xf32>
    %48 = arith.addf %39, %47 : vector<8x256xf32>
    %49 = vector.extract_strided_slice %0 {offsets = [0, 5], sizes = [8, 1], strides = [1, 1]} : vector<8x6xi32> to vector<8x1xi32>
    %50 = vector.broadcast %49 : vector<8x1xi32> to vector<8x256xi32>
    %51 = arith.cmpi eq, %2, %50 : vector<8x256xi32>
    %52 = vector.extract_strided_slice %1 {offsets = [0, 5], sizes = [8, 1], strides = [1, 1]} : vector<8x6xf32> to vector<8x1xf32>
    %cst_8 = arith.constant 0.000000e+00 : f32
    %53 = vector.shape_cast %52 : vector<8x1xf32> to vector<8x1xf32>
    %54 = vector.broadcast %53 : vector<8x1xf32> to vector<8x256xf32>
    %55 = vector.broadcast %cst_8 : f32 to vector<8x256xf32>
    %56 = arith.select %51, %54, %55 : vector<8x256xi1>, vector<8x256xf32>
    %57 = arith.addf %48, %56 : vector<8x256xf32>
    %58 = arith.truncf %57 : vector<8x256xf32> to vector<8x256xbf16>
    %c0_9 = arith.constant 0 : index
    %c0_10 = arith.constant 0 : index
    %59 = vector.load %arg3[%c0_9, %c0_10] : memref<256x128xf32, #tpu.memory_space<vmem>>, vector<256x128xf32>
    %60 = arith.truncf %59 : vector<256x128xf32> to vector<256x128xbf16>
    %cst_11 = arith.constant dense<0.000000e+00> : vector<8x128xf32>
    %61 = tpu.matmul %58, %60, %cst_11 {dimension_numbers = #tpu.dot_dimension_numbers<[1], [0], [0], [1], [0, 0, 1, 1], [], []>} : vector<8x256xbf16>, vector<256x128xbf16>, vector<8x128xf32> -> vector<8x128xf32>
    %cst_12 = arith.constant dense<0.000000e+00> : vector<8xf32>
    %62 = vector.multi_reduction <add>, %1, %cst_12 [1] : vector<8x6xf32> to vector<8xf32>
    %63 = vector.shape_cast %62 : vector<8xf32> to vector<8x1xf32>
    %cst_13 = arith.constant 0.000000e+00 : f32
    %64 = vector.broadcast %cst_13 : f32 to vector<8x1xf32>
    %65 = arith.cmpf ogt, %63, %64 : vector<8x1xf32>
    %cst_14 = arith.constant 1.000000e-30 : f32
    %66 = vector.broadcast %cst_14 : f32 to vector<8x1xf32>
    %67 = arith.maximumf %63, %66 : vector<8x1xf32>
    %68 = tpu.reciprocal %67 {approx = true} : vector<8x1xf32> -> vector<8x1xf32>
    %cst_15 = arith.constant 0.000000e+00 : f32
    %69 = vector.broadcast %cst_15 : f32 to vector<8x1xf32>
    %70 = arith.select %65, %68, %69 : vector<8x1xi1>, vector<8x1xf32>
    %71 = vector.broadcast %70 : vector<8x1xf32> to vector<8x128xf32>
    %72 = arith.mulf %61, %71 : vector<8x128xf32>
    %c0_16 = arith.constant 0 : index
    %c0_17 = arith.constant 0 : index
    %73 = vector.load %arg4[%c0_16, %c0_17] : memref<8x128xf32, #tpu.memory_space<vmem>>, vector<8x128xf32>
    tpu.vector_store %arg4[%c0_16, %c0_17], %72 {strides = array<i32>} : memref<8x128xf32, #tpu.memory_space<vmem>>, vector<8x128xf32>,
    return
  }
  func.func @transform_0(%arg0: i32) -> (i32, i32) {
    %c0_i32 = arith.constant 0 : i32
    %c0_i32_0 = arith.constant 0 : i32
    return %arg0, %c0_i32 : i32, i32
  }
  func.func @transform_1(%arg0: i32) -> (i32, i32) {
    %c0_i32 = arith.constant 0 : i32
    %c0_i32_0 = arith.constant 0 : i32
    return %arg0, %c0_i32 : i32, i32
  }
  func.func @transform_2(%arg0: i32) -> (i32, i32) {
    %c0_i32 = arith.constant 0 : i32
    %c0_i32_0 = arith.constant 0 : i32
    %c0_i32_1 = arith.constant 0 : i32
    return %c0_i32, %c0_i32_0 : i32, i32
  }
  func.func @transform_3(%arg0: i32) -> (i32, i32) {
    %c0_i32 = arith.constant 0 : i32
    %c0_i32_0 = arith.constant 0 : i32
    return %arg0, %c0_i32 : i32, i32
  }
}

</mosaic_0001>

<llo_original>
// kernel: tpu_custom_call.1
$region0: #{tpu_custom_call.1}
  #allocation0 [shape = 'u32[]', space=smem, size = 0x4, offset = 0x4, fixed_abs, tag = 'smem constant byte address 0x4 - core index']
  #allocation1 [shape = 'u32[72,128]{1,0:T(1,128)}', space=vmem, size = 0x9000, scoped, tag = 'internal scratch']
  %s0 = inlined_call_operand.hbm [shape: s32[8,6], index: 0, kind: input, shape index: {}]
  %s1 = inlined_call_operand.hbm [shape: f32[8,6], index: 1, kind: input, shape index: {}]
  %s2 = inlined_call_operand.hbm [shape: f32[256,128], index: 2, kind: input, shape index: {}]
  %s3 = inlined_call_operand.hbm [shape: f32[8,128], index: 3, kind: output, shape index: {}]
  %s4 = sld [smem:[#allocation0]]
  $region34: #{tpu_custom_call.1} parent=0
    _
  %s6 = ssub.s32 1, %s4
  %s7 = scalar_select 0, %s6, %s4
  $region1: #{tpu_custom_call.1} parent=0
    #allocation2 [shape = 'u8[4096]{0}', space=vmem, size = 0x1000, scoped, tag = 'input window, operand 0, single buffered']
    #allocation3 [shape = 's32[1]{0}', space=sflag, size = 0x4, scoped, tag = 'scoped memory for tpu_custom_call.1']
    #allocation4 [shape = 's32[1]{0}', space=sflag, size = 0x4, scoped, tag = 'scoped memory for tpu_custom_call.1']
    #allocation5 [shape = 'u8[4096]{0}', space=vmem, size = 0x1000, scoped, tag = 'input window, operand 1, single buffered']
    #allocation6 [shape = 's32[1]{0}', space=sflag, size = 0x4, scoped, tag = 'scoped memory for tpu_custom_call.1']
    #allocation7 [shape = 'u8[131072]{0}', space=vmem, size = 0x20000, scoped, tag = 'input window, operand 2, single buffered']
    #allocation8 [shape = 'u8[4096]{0}', space=vmem, size = 0x1000, scoped, tag = 'output window, operand 0, single buffered']
    %8 = vsyncpa [#allocation3], 0
    %9 = vsyncpa [#allocation6], 0
    %10 = vsyncpa [#allocation4], 0
    // Predicated region
    $region2: #{tpu_custom_call.1} parent=1 // pred_check
      _
    $region3: #{tpu_custom_call.1} parent=1 // pred_check_branch
      %12 = sbr.rel (0) target = $region5
    $region4: #{tpu_custom_call.1} parent=1 // pred_region
      %14 = vsyncadd [#allocation3], 0
      %s16 = sshll.u32 %s0, 4
      %s17 = int_to_ptr.hbm [resolvable:$true] %s16
      %s18 = sshll.u32 [#allocation2], 4
      %s19 = int_to_ptr.vmem [resolvable:$true] %s18
      %21 = dma.hbm_to_vmem [thread:$0]  %s17, 128, %s19, [#allocation3]
    $region5: #{tpu_custom_call.1} parent=1 // pred_fallthru
      _
    // Predicated region
    $region6: #{tpu_custom_call.1} parent=1 // pred_check
      _
    $region7: #{tpu_custom_call.1} parent=1 // pred_check_branch
      %23 = sbr.rel (0) target = $region9
    $region8: #{tpu_custom_call.1} parent=1 // pred_region
      %25 = vsyncadd [#allocation6], 0
      %s27 = sshll.u32 %s1, 4
      %s28 = int_to_ptr.hbm [resolvable:$true] %s27
      %s29 = sshll.u32 [#allocation5], 4
      %s30 = int_to_ptr.vmem [resolvable:$true] %s29
      %32 = dma.hbm_to_vmem [thread:$0]  %s28, 128, %s30, [#allocation6]
    $region9: #{tpu_custom_call.1} parent=1 // pred_fallthru
      _
    // Predicated region
    $region10: #{tpu_custom_call.1} parent=1 // pred_check
      _
    $region11: #{tpu_custom_call.1} parent=1 // pred_check_branch
      %34 = sbr.rel (0) target = $region13
    $region12: #{tpu_custom_call.1} parent=1 // pred_region
      %36 = vsyncadd [#allocation6], 0
      %s37 = sshll.u32 %s2, 4
      %s38 = int_to_ptr.hbm [resolvable:$true] %s37
      %s39 = sshll.u32 [#allocation7], 4
      %s40 = int_to_ptr.vmem [resolvable:$true] %s39
      %45 = dma.hbm_to_vmem [thread:$0]  %s38, 4096, %s40, [#allocation6], 128, 128, 8
    $region13: #{tpu_custom_call.1} parent=1 // pred_fallthru
      _
    // Predicated region
    $region14: #{tpu_custom_call.1} parent=1 // pred_check
      _
    $region15: #{tpu_custom_call.1} parent=1 // pred_check_branch
      %47 = sbr.rel (0) target = $region17
    $region16: #{tpu_custom_call.1} parent=1 // pred_region
      %49 = dma.done [#allocation3], 128
    $region17: #{tpu_custom_call.1} parent=1 // pred_fallthru
      _
    // Predicated region
    $region18: #{tpu_custom_call.1} parent=1 // pred_check
      _
    $region19: #{tpu_custom_call.1} parent=1 // pred_check_branch
      %51 = sbr.rel (0) target = $region21
    $region20: #{tpu_custom_call.1} parent=1 // pred_region
      %53 = dma.done [#allocation6], 128
    $region21: #{tpu_custom_call.1} parent=1 // pred_fallthru
      _
    // Predicated region
    $region22: #{tpu_custom_call.1} parent=1 // pred_check
      _
    $region23: #{tpu_custom_call.1} parent=1 // pred_check_branch
      %55 = sbr.rel (0) target = $region25
    $region24: #{tpu_custom_call.1} parent=1 // pred_region
      %57 = dma.done [#allocation6], 4096
    $region25: #{tpu_custom_call.1} parent=1 // pred_fallthru
      _
    %v58 = vld [vmem:[#allocation2] sm:$0xff]
    %v59 = vld [vmem:[#allocation5] sm:$0xff]
    %v60 = vlaneseq
    %v61 = vand.u32 %v60, 127
    %v62 = vadd.s32 %v61, 128
    %63 = vset.pattern.permute.xlu0 0
    %64 = vperm.xlu0 %63, %v58
    %v65 = vpop.permute.xlu0 %64
    %vm66 = vcmp.eq.s32.totalorder %v61, %v65
    %vm67 = vcmp.eq.s32.totalorder %v62, %v65
    %69 = vset.pattern.permute.xlu0 0
    %70 = vperm.xlu0 %69, %v59
    %v71 = vpop.permute.xlu0 %70
    %v73 = vsel %vm66, %v71, 0.0
    %v74 = vsel %vm67, %v71, 0.0
    %v75 = vadd.f32 %v73, 0.0
    %v76 = vadd.f32 %v74, 0.0
    %77 = vset.pattern.permute.xlu0 1
    %78 = vperm.xlu0 %77, %v58
    %v79 = vpop.permute.xlu0 %78
    %vm80 = vcmp.eq.s32.totalorder %v61, %v79
    %vm81 = vcmp.eq.s32.totalorder %v62, %v79
    %82 = vset.pattern.permute.xlu0 1
    %83 = vperm.xlu0 %82, %v59
    %v84 = vpop.permute.xlu0 %83
    %v86 = vsel %vm80, %v84, 0.0
    %v87 = vsel %vm81, %v84, 0.0
    %v88 = vadd.f32 %v75, %v86
    %v89 = vadd.f32 %v76, %v87
    %90 = vset.pattern.permute.xlu0 2
    %91 = vperm.xlu0 %90, %v58
    %v92 = vpop.permute.xlu0 %91
    %vm93 = vcmp.eq.s32.totalorder %v61, %v92
    %vm94 = vcmp.eq.s32.totalorder %v62, %v92
    %95 = vset.pattern.permute.xlu0 2
    %96 = vperm.xlu0 %95, %v59
    %v97 = vpop.permute.xlu0 %96
    %v99 = vsel %vm93, %v97, 0.0
    %v100 = vsel %vm94, %v97, 0.0
    %v101 = vadd.f32 %v88, %v99
    %v102 = vadd.f32 %v89, %v100
    %103 = vset.pattern.permute.xlu0 3
    %104 = vperm.xlu0 %103, %v58
    %v105 = vpop.permute.xlu0 %104
    %vm106 = vcmp.eq.s32.totalorder %v61, %v105
    %vm107 = vcmp.eq.s32.totalorder %v62, %v105
    %108 = vset.pattern.permute.xlu0 3
    %109 = vperm.xlu0 %108, %v59
    %v110 = vpop.permute.xlu0 %109
    %v112 = vsel %vm106, %v110, 0.0
    %v113 = vsel %vm107, %v110, 0.0
    %v114 = vadd.f32 %v101, %v112
    %v115 = vadd.f32 %v102, %v113
    %116 = vset.pattern.permute.xlu0 4
    %117 = vperm.xlu0 %116, %v58
    %v118 = vpop.permute.xlu0 %117
    %vm119 = vcmp.eq.s32.totalorder %v61, %v118
    %vm120 = vcmp.eq.s32.totalorder %v62, %v118
    %121 = vset.pattern.permute.xlu0 4
    %122 = vperm.xlu0 %121, %v59
    %v123 = vpop.permute.xlu0 %122
    %v125 = vsel %vm119, %v123, 0.0
    %v126 = vsel %vm120, %v123, 0.0
    %v127 = vadd.f32 %v114, %v125
    %v128 = vadd.f32 %v115, %v126
    %129 = vset.pattern.permute.xlu0 5
    %130 = vperm.xlu0 %129, %v58
    %v131 = vpop.permute.xlu0 %130
    %vm132 = vcmp.eq.s32.totalorder %v61, %v131
    %vm133 = vcmp.eq.s32.totalorder %v62, %v131
    %134 = vset.pattern.permute.xlu0 5
    %135 = vperm.xlu0 %134, %v59
    %v136 = vpop.permute.xlu0 %135
    %v138 = vsel %vm132, %v136, 0.0
    %v139 = vsel %vm133, %v136, 0.0
    %v140 = vadd.f32 %v127, %v138
    %v141 = vadd.f32 %v128, %v139
    %v142 = vpack.c.bf16 %v140, %v140
    %v143 = vpack.c.bf16 %v141, %v141
    %v144 = vld [vmem:[#allocation7] sm:$0xff]
    %v145 = vld [vmem:[#allocation7 + $0x8] sm:$0xff]
    %v146 = vld [vmem:[#allocation7 + $0x10] sm:$0xff]
    %v147 = vld [vmem:[#allocation7 + $0x18] sm:$0xff]
    %v148 = vld [vmem:[#allocation7 + $0x20] sm:$0xff]
    %v149 = vld [vmem:[#allocation7 + $0x28] sm:$0xff]
    %v150 = vld [vmem:[#allocation7 + $0x30] sm:$0xff]
    %v151 = vld [vmem:[#allocation7 + $0x38] sm:$0xff]
    %v152 = vld [vmem:[#allocation7 + $0x40] sm:$0xff]
    %v153 = vld [vmem:[#allocation7 + $0x48] sm:$0xff]
    %v154 = vld [vmem:[#allocation7 + $0x50] sm:$0xff]
    %v155 = vld [vmem:[#allocation7 + $0x58] sm:$0xff]
    %v156 = vld [vmem:[#allocation7 + $0x60] sm:$0xff]
    %v157 = vld [vmem:[#allocation7 + $0x68] sm:$0xff]
    %v158 = vld [vmem:[#allocation7 + $0x70] sm:$0xff]
    %v159 = vld [vmem:[#allocation7 + $0x78] sm:$0xff]
    %v160 = vld [vmem:[#allocation7 + $0x80] sm:$0xff]
    %v161 = vld [vmem:[#allocation7 + $0x88] sm:$0xff]
    %v162 = vld [vmem:[#allocation7 + $0x90] sm:$0xff]
    %v163 = vld [vmem:[#allocation7 + $0x98] sm:$0xff]
    %v164 = vld [vmem:[#allocation7 + $0xa0] sm:$0xff]
    %v165 = vld [vmem:[#allocation7 + $0xa8] sm:$0xff]
    %v166 = vld [vmem:[#allocation7 + $0xb0] sm:$0xff]
    %v167 = vld [vmem:[#allocation7 + $0xb8] sm:$0xff]
    %v168 = vld [vmem:[#allocation7 + $0xc0] sm:$0xff]
    %v169 = vld [vmem:[#allocation7 + $0xc8] sm:$0xff]
    %v170 = vld [vmem:[#allocation7 + $0xd0] sm:$0xff]
    %v171 = vld [vmem:[#allocation7 + $0xd8] sm:$0xff]
    %v172 = vld [vmem:[#allocation7 + $0xe0] sm:$0xff]
    %v173 = vld [vmem:[#allocation7 + $0xe8] sm:$0xff]
    %v174 = vld [vmem:[#allocation7 + $0xf0] sm:$0xff]
    %v175 = vld [vmem:[#allocation7 + $0xf8] sm:$0xff]
    %v176 = vpack.c.bf16 %v145, %v144
    %v177 = vpack.c.bf16 %v147, %v146
    %v178 = vpack.c.bf16 %v149, %v148
    %v179 = vpack.c.bf16 %v151, %v150
    %v180 = vpack.c.bf16 %v153, %v152
    %v181 = vpack.c.bf16 %v155, %v154
    %v182 = vpack.c.bf16 %v157, %v156
    %v183 = vpack.c.bf16 %v159, %v158
    %v184 = vpack.c.bf16 %v161, %v160
    %v185 = vpack.c.bf16 %v163, %v162
    %v186 = vpack.c.bf16 %v165, %v164
    %v187 = vpack.c.bf16 %v167, %v166
    %v188 = vpack.c.bf16 %v169, %v168
    %v189 = vpack.c.bf16 %v171, %v170
    %v190 = vpack.c.bf16 %v173, %v172
    %v191 = vpack.c.bf16 %v175, %v174
    %192 = vmatpush.bf16.msra.mxu0 %v183
    %193 = vmatpush.bf16.msra.mxu0 %v182
    %194 = vmatpush.bf16.msra.mxu0 %v181
    %195 = vmatpush.bf16.msra.mxu0 %v180
    %196 = vmatpush.bf16.msra.mxu0 %v179
    %197 = vmatpush.bf16.msra.mxu0 %v178
    %198 = vmatpush.bf16.msra.mxu0 %v177
    %199 = vmatpush.bf16.msra.mxu0 %v176
    %200 = vmatmul.bf16.gmra.mxu0 %v142
    %v201 = vpop.f32.mrf.mxu0
    %v202 = vadd.f32 0.0, %v201
    %v203 = vpop.f32.mrf.mxu0
    %204 = vdwg.mxu0
    %205 = vmatpush.bf16.msra.mxu0 %v191
    %206 = vmatpush.bf16.msra.mxu0 %v190
    %207 = vmatpush.bf16.msra.mxu0 %v189
    %208 = vmatpush.bf16.msra.mxu0 %v188
    %209 = vmatpush.bf16.msra.mxu0 %v187
    %210 = vmatpush.bf16.msra.mxu0 %v186
    %211 = vmatpush.bf16.msra.mxu0 %v185
    %212 = vmatpush.bf16.msra.mxu0 %v184
    %213 = vmatmul.bf16.gmra.mxu0 %v143
    %v214 = vpop.f32.mrf.mxu0
    %v215 = vadd.f32 %v202, %v214
    %v216 = vpop.f32.mrf.mxu0
    %217 = vdwg.mxu0
    %vm218 = vcmask 48128
    %v219 = vsel %vm218, %v59, 0.0
    %220 = vadd.xlane.f32.xlu0 %v219
    %v221 = vpop.xlane.xlu0 %220
    %vm222 = vcmp.gt.f32.partialorder %v221, 0.0
    %v223 = vmax.f32 %v221, 1e-30
    %v224 = vrcp.pop %v223
    %v225 = vsel %vm222, %v224, 0.0
    %v226 = vmul.f32 %v215, %v225
    %227 = vst [vmem:[#allocation8] sm:$0xff] %v226
    // Predicated region
    $region26: #{tpu_custom_call.1} parent=1 // pred_check
      _
    $region27: #{tpu_custom_call.1} parent=1 // pred_check_branch
      %229 = sbr.rel (0) target = $region29
    $region28: #{tpu_custom_call.1} parent=1 // pred_region
      %231 = vsyncadd [#allocation4], 0
      %s233 = sshll.u32 [#allocation8], 4
      %s234 = int_to_ptr.vmem [resolvable:$true] %s233
      %s235 = sshll.u32 %s3, 4
      %s236 = int_to_ptr.hbm [resolvable:$true] %s235
      %238 = dma.vmem_to_hbm [thread:$0]  %s234, 128, %s236, [#allocation4]
    $region29: #{tpu_custom_call.1} parent=1 // pred_fallthru
      _
    // Predicated region
    $region30: #{tpu_custom_call.1} parent=1 // pred_check
      _
    $region31: #{tpu_custom_call.1} parent=1 // pred_check_branch
      %240 = sbr.rel (0) target = $region33
    $region32: #{tpu_custom_call.1} parent=1 // pred_region
      %242 = dma.done [#allocation4], 128
    $region33: #{tpu_custom_call.1} parent=1 // pred_fallthru
      _
    %243 = vsyncpa [#allocation3], 1
    %244 = vsyncpa [#allocation6], 1
    %245 = vsyncpa [#allocation4], 1

</llo_original>
